<compile_context>
chip_gen: v6e
topology: v6e:2x2x1
jax: 0.10.0
libtpu: 0.0.40
codegen_flags: <defaults>
</compile_context>

<pallas_src>
import functools

import jax
import jax.numpy as jnp
from jax.experimental import pallas as pl
from jax.experimental.pallas import tpu as pltpu

_LANE = 128
_SUBLANE = 8
_NEG = -1e9  # bias of the tail pad columns of the cat slab -> prob exactly 0


def _round_up(x, m):
    return (x + m - 1) // m * m


def _cdiv(a, b):
    return -(-a // b)


def _batch_tiling(b, block_rows):
    """Row-tile size / #blocks / padded batch.  >=2 blocks when b>8 (v7x)."""
    if b <= _SUBLANE:
        tb = _round_up(b, _SUBLANE)
        n_blocks = 1
    else:
        n_blocks = max(_cdiv(b, block_rows), 2)
        tb = _round_up(_cdiv(b, n_blocks), _SUBLANE)
        n_blocks = _cdiv(b, tb)
    return tb, n_blocks, tb * n_blocks


# --------------------------------------------------------------------------
# Kernel
# --------------------------------------------------------------------------
def _generator_kernel(x_ref, w1_ref, b1_ref, w2_ref, b2_ref, g_ref, out_ref, *,
                      nc_pad, cat_pad, head_slices, inv_tau, matmul_dtype):
    # h = relu(x @ W1 + b1); bf16 operands, f32 MXU accumulation.
    h = jnp.maximum(
        jnp.dot(x_ref[...], w1_ref[...], preferred_element_type=jnp.float32)
        + b1_ref[...], 0.0)

    # Fused projection: numerical head + compact categorical slab, one matmul.
    z = (jnp.dot(h.astype(matmul_dtype), w2_ref[...],
                 preferred_element_type=jnp.float32) + b2_ref[...])

    # Numerical head (right-aligned inside the first nc_pad columns; leading
    # pad columns are exactly 0 -> relu keeps them 0).  Lane-dense store.
    out_ref[:, :nc_pad] = jnp.maximum(z[:, :nc_pad], 0.0)

    # Categorical slab: segmented gumbel-softmax over the compact packing.
    logits = (z[:, nc_pad:] + g_ref[...]) * inv_tau            # [tb, cat_pad]

    col = jax.lax.broadcasted_iota(jnp.int32, (1, cat_pad), 1)
    masks = [(col >= lo) & (col < hi) for lo, hi in head_slices]  # static

    # Per-head max, broadcast back to the packed layout (XLU reduces).
    neg = jnp.float32(-1e30)
    m = jnp.zeros_like(logits)
    for msk in masks:
        mk = jnp.max(jnp.where(msk, logits, neg), axis=-1, keepdims=True)
        m = jnp.where(msk, mk, m)

    # Single exp pass; tail pad columns have bias -1e9 -> exp underflows to 0.
    e = jnp.exp(logits - m)

    # Per-head normalization via EUP reciprocal; pad columns keep denominator
    # 1 so they stay exactly 0.
    r = jnp.ones_like(logits)
    for msk in masks:
        sk = jnp.sum(jnp.where(msk, e, 0.0), axis=-1, keepdims=True)
        r = jnp.where(msk, pl.reciprocal(sk, approx=True), r)

    # One wide, lane-dense store for the whole categorical slab.
    out_ref[:, nc_pad:] = e * r


# --------------------------------------------------------------------------
# Parameter packing (pad + fuse into the kernel layout)
# --------------------------------------------------------------------------
def pack_params(logical_params, *, input_dim, num_continuous, cat_sizes,
                matmul_dtype=jnp.bfloat16):
    assert num_continuous >= 1 and len(cat_sizes) >= 1
    w1, b1, w_num, b_num, w_cat, b_cat = logical_params
    d, nc, n_heads = input_dim, num_continuous, len(cat_sizes)
    sum_v = sum(cat_sizes)
    d_pad = _round_up(d, _LANE)
    nc_pad = _round_up(nc, _LANE)
    cat_pad = _round_up(sum_v, _LANE)          # compact slab, one 128-multiple
    out_pad = nc_pad + cat_pad
    num_off = nc_pad - nc                      # numerical head right-aligned

    w1_p = jnp.zeros((d_pad, d_pad), jnp.float32).at[:d, :d].set(w1)
    b1_p = jnp.zeros((1, d_pad), jnp.float32).at[:, :d].set(b1)

    w2_p = jnp.zeros((d_pad, out_pad), jnp.float32)
    b2_p = jnp.zeros((1, out_pad), jnp.float32)
    w2_p = w2_p.at[:d, num_off:num_off + nc].set(w_num)
    b2_p = b2_p.at[:, num_off:num_off + nc].set(b_num)
    b2_p = b2_p.at[:, nc_pad + sum_v:].set(_NEG)   # kill tail pad columns only

    off = 0
    head_slices = []
    for k, v in enumerate(cat_sizes):
        c0 = nc_pad + off
        w2_p = w2_p.at[:d, c0:c0 + v].set(w_cat[k])
        b2_p = b2_p.at[:, c0:c0 + v].set(b_cat[k])
        head_slices.append((off, off + v))         # relative to slab start
        off += v

    dims = dict(d=d, d_pad=d_pad, nc=nc, nc_pad=nc_pad, num_off=num_off,
                sum_v=sum_v, cat_pad=cat_pad, out_pad=out_pad,
                n_heads=n_heads, cat_sizes=tuple(cat_sizes),
                head_slices=tuple(head_slices))
    return (w1_p.astype(matmul_dtype), b1_p,
            w2_p.astype(matmul_dtype), b2_p, dims)


def gumbel_noise_shape(packed, batch, *, block_rows=1024):
    """Padded shape at which the caller should sample Gumbel(0,1) noise."""
    dims = packed[-1]
    _, _, b_pad = _batch_tiling(batch, block_rows)
    return (b_pad, dims["cat_pad"])


# --------------------------------------------------------------------------
# Forward wrapper
# --------------------------------------------------------------------------
def generator_forward(x, packed, gumbel_noise, *, tau=0.2,
                      matmul_dtype=jnp.bfloat16, block_rows=1024):
    """x: [B, D] f32; gumbel_noise: [b_pad, cat_pad] (preferred, bf16) or
    compact [B, sum(Vk)].  Returns [B, Nc + sum(Vk)] f32 (module layout)."""
    w1_p, b1_p, w2_p, b2_p, dims = packed
    b, d = x.shape
    assert d == dims["d"]
    d_pad, nc_pad, cat_pad = dims["d_pad"], dims["nc_pad"], dims["cat_pad"]
    out_pad, sum_v = dims["out_pad"], dims["sum_v"]
    nc, n_heads, num_off = dims["nc"], dims["n_heads"], dims["num_off"]

    tb, n_blocks, b_pad = _batch_tiling(b, block_rows)

    # x: skip the pad/cast pass entirely when the layout already matches.
    if (b, d) == (b_pad, d_pad) and x.dtype == matmul_dtype:
        x_p = x
    else:
        x_p = jnp.zeros((b_pad, d_pad), matmul_dtype).at[:b, :d].set(
            x.astype(matmul_dtype))

    # Gumbel noise: preferred path is pre-sampled at the padded layout (no
    # scatter, no extra HBM pass); fall back to a single pad of compact noise.
    if gumbel_noise.shape == (b_pad, cat_pad):
        g_p = gumbel_noise
    else:
        assert gumbel_noise.shape == (b, sum_v), gumbel_noise.shape
        g_p = jnp.zeros((b_pad, cat_pad), gumbel_noise.dtype).at[
            :b, :sum_v].set(gumbel_noise)

    kernel = functools.partial(
        _generator_kernel, nc_pad=nc_pad, cat_pad=cat_pad,
        head_slices=dims["head_slices"], inv_tau=float(1.0 / tau),
        matmul_dtype=matmul_dtype)

    w_item = jnp.dtype(matmul_dtype).itemsize
    g_item = jnp.dtype(g_p.dtype).itemsize
    tile_bytes = tb * (d_pad * w_item + cat_pad * g_item + out_pad * 4)
    resident_bytes = (d_pad * d_pad + d_pad * out_pad) * w_item \
        + (d_pad + out_pad) * 4
    # BlockSpec double-buffers streamed tiles AND the constant-index residents.
    vmem_limit = int(min(max(2 * tile_bytes + 2 * resident_bytes + (4 << 20),
                             16 << 20), 64 << 20))

    cost = pl.CostEstimate(
        flops=int(2 * b_pad * d_pad * (d_pad + out_pad)),
        transcendentals=int(b_pad * (cat_pad + n_heads)),
        bytes_accessed=int(b_pad * d_pad * w_item + b_pad * cat_pad * g_item
                           + b_pad * out_pad * 4 + resident_bytes),
    )

    out_p = pl.pallas_call(
        kernel,
        out_shape=jax.ShapeDtypeStruct((b_pad, out_pad), jnp.float32),
        grid=(n_blocks,),
        in_specs=[
            pl.BlockSpec((tb, d_pad), lambda i: (i, 0)),        # x tile
            pl.BlockSpec((d_pad, d_pad), lambda i: (0, 0)),     # W1 resident
            pl.BlockSpec((1, d_pad), lambda i: (0, 0)),         # b1 resident
            pl.BlockSpec((d_pad, out_pad), lambda i: (0, 0)),   # W2 resident
            pl.BlockSpec((1, out_pad), lambda i: (0, 0)),       # b2 resident
            pl.BlockSpec((tb, cat_pad), lambda i: (i, 0)),      # gumbel tile
        ],
        out_specs=pl.BlockSpec((tb, out_pad), lambda i: (i, 0)),
        compiler_params=pltpu.CompilerParams(
            dimension_semantics=("parallel",),
            vmem_limit_bytes=vmem_limit),
        cost_estimate=cost,
    )(x_p, w1_p, b1_p, w2_p, b2_p, g_p)

    # Single contiguous slice back to the module's compact layout: the
    # numerical head is right-aligned at num_off, the compact categorical slab
    # starts immediately after it at nc_pad.
    return out_p[:b, num_off:num_off + nc + sum_v]


# --------------------------------------------------------------------------
# Init + pure-JAX reference
# --------------------------------------------------------------------------
def init_params(key, input_dim, num_continuous, cat_sizes):
    ks = jax.random.split(key, 4 + 2 * len(cat_sizes))
    w1 = jax.random.normal(ks[0], (input_dim, input_dim), jnp.float32) * 0.1
    b1 = jax.random.normal(ks[1], (1, input_dim), jnp.float32) * 0.1
    w_num = jax.random.normal(ks[2], (input_dim, num_continuous),
                              jnp.float32) * 0.1
    b_num = jax.random.normal(ks[3], (1, num_continuous), jnp.float32) * 0.1
    w_cat, b_cat = [], []
    for k, v in enumerate(cat_sizes):
        w_cat.append(jax.random.normal(ks[4 + 2 * k], (input_dim, v),
                                       jnp.float32) * 0.1)
        b_cat.append(jax.random.normal(ks[5 + 2 * k], (1, v),
                                       jnp.float32) * 0.1)
    return w1, b1, w_num, b_num, tuple(w_cat), tuple(b_cat)


def reference_forward(x, logical_params, gumbel_noise, *, num_continuous,
                      cat_sizes, tau=0.2, matmul_dtype=jnp.bfloat16):
    """Pure-JAX reference (same dtype policy: bf16 operands, f32 accumulate)."""
    w1, b1, w_num, b_num, w_cat, b_cat = logical_params
    xm = x.astype(matmul_dtype)
    h = jax.nn.relu(jnp.dot(xm, w1.astype(matmul_dtype),
                            preferred_element_type=jnp.float32) + b1)
    hm = h.astype(matmul_dtype)
    z_num = jnp.dot(hm, w_num.astype(matmul_dtype),
                    preferred_element_type=jnp.float32) + b_num
    outs = [jax.nn.relu(z_num)]
    off = 0
    for k, v in enumerate(cat_sizes):
        z = jnp.dot(hm, w_cat[k].astype(matmul_dtype),
                    preferred_element_type=jnp.float32) + b_cat[k]
        logits = (z + gumbel_noise[:, off:off + v]) / tau
        outs.append(jax.nn.softmax(logits, axis=-1))
        off += v
    return jnp.concatenate(outs, axis=1)


# --------------------------------------------------------------------------
if __name__ == "__main__":
    # Small deterministic example consistent with the module's forward:
    # input_dim=32, 3 continuous columns, 2 discrete columns (4 and 5
    # categories), batch=8, tau=0.2.
    batch = 8
    input_dim = 32
    num_continuous = 3
    cat_sizes = (4, 5)
    tau = 0.2

    key = jax.random.PRNGKey(0)
    k_x, k_p, k_g = jax.random.split(key, 3)

    x = jax.random.normal(k_x, (batch, input_dim), jnp.float32)
    logical = init_params(k_p, input_dim, num_continuous, cat_sizes)
    packed = pack_params(logical, input_dim=input_dim,
                         num_continuous=num_continuous, cat_sizes=cat_sizes)

    # Gumbel(0,1) noise sampled directly at the padded kernel layout, streamed
    # as bf16 (the reference consumes the identical bf16-rounded values).
    g_shape = gumbel_noise_shape(packed, batch)
    gumbel = jax.random.gumbel(k_g, g_shape, jnp.float32).astype(jnp.bfloat16)

    out = generator_forward(x, packed, gumbel, tau=tau)
    out = jax.block_until_ready(out)

    gumbel_compact = gumbel[:batch, :sum(cat_sizes)].astype(jnp.float32)
    ref = reference_forward(x, logical, gumbel_compact,
                            num_continuous=num_continuous,
                            cat_sizes=cat_sizes, tau=tau)

    out_dim = num_continuous + sum(cat_sizes)
    assert out.shape == (batch, out_dim), out.shape
    # Tolerance covers the EUP approx reciprocal in the kernel softmax and the
    # bf16 matmul operands (f32 accumulation on both kernel and reference).
    assert jnp.allclose(out, ref, atol=2e-2, rtol=2e-2), \
        float(jnp.max(jnp.abs(out - ref)))
    print("KERNEL_OK")
</pallas_src>

<mosaic_0001>
module attributes {stable_mosaic.version = 11 : i64} {
  func.func @_generator_kernel(%arg0: i32, %arg1: memref<8x128xbf16, #tpu.memory_space<vmem>>, %arg2: memref<128x128xbf16, #tpu.memory_space<vmem>>, %arg3: memref<1x128xf32, #tpu.memory_space<vmem>>, %arg4: memref<128x256xbf16, #tpu.memory_space<vmem>>, %arg5: memref<1x256xf32, #tpu.memory_space<vmem>>, %arg6: memref<8x128xbf16, #tpu.memory_space<vmem>>, %arg7: memref<8x256xf32, #tpu.memory_space<vmem>>) attributes {dimension_semantics = [#tpu.dimension_semantics<parallel>], iteration_bounds = array<i64: 1>, scalar_prefetch = 0 : i64, scratch_operands = 0 : i64, tpu.core_type = #tpu.core_type<tc>, window_params = [{transform_indices = @transform_0, window_bounds = array<i64: 8, 128>}, {pipeline_mode = #tpu.pipeline_mode<synchronous>, transform_indices = @transform_1, window_bounds = array<i64: 128, 128>}, {pipeline_mode = #tpu.pipeline_mode<synchronous>, transform_indices = @transform_2, window_bounds = array<i64: 1, 128>}, {pipeline_mode = #tpu.pipeline_mode<synchronous>, transform_indices = @transform_3, window_bounds = array<i64: 128, 256>}, {pipeline_mode = #tpu.pipeline_mode<synchronous>, transform_indices = @transform_4, window_bounds = array<i64: 1, 256>}, {transform_indices = @transform_5, window_bounds = array<i64: 8, 128>}, {transform_indices = @transform_6, window_bounds = array<i64: 8, 256>}]} {
    %c0 = arith.constant 0 : index
    %c0_0 = arith.constant 0 : index
    %0 = vector.load %arg1[%c0, %c0_0] : memref<8x128xbf16, #tpu.memory_space<vmem>>, vector<8x128xbf16>
    %c0_1 = arith.constant 0 : index
    %c0_2 = arith.constant 0 : index
    %1 = vector.load %arg2[%c0_1, %c0_2] : memref<128x128xbf16, #tpu.memory_space<vmem>>, vector<128x128xbf16>
    %cst = arith.constant dense<0.000000e+00> : vector<8x128xf32>
    %2 = tpu.matmul %0, %1, %cst {dimension_numbers = #tpu.dot_dimension_numbers<[1], [0], [0], [1], [0, 0, 1, 1], [], []>} : vector<8x128xbf16>, vector<128x128xbf16>, vector<8x128xf32> -> vector<8x128xf32>
    %c0_3 = arith.constant 0 : index
    %c0_4 = arith.constant 0 : index
    %3 = vector.load %arg3[%c0_3, %c0_4] : memref<1x128xf32, #tpu.memory_space<vmem>>, vector<1x128xf32>
    %4 = vector.broadcast %3 : vector<1x128xf32> to vector<8x128xf32>
    %5 = arith.addf %2, %4 : vector<8x128xf32>
    %cst_5 = arith.constant 0.000000e+00 : f32
    %6 = vector.broadcast %cst_5 : f32 to vector<8x128xf32>
    %7 = arith.maximumf %5, %6 : vector<8x128xf32>
    %8 = arith.truncf %7 : vector<8x128xf32> to vector<8x128xbf16>
    %c0_6 = arith.constant 0 : index
    %c0_7 = arith.constant 0 : index
    %9 = vector.load %arg4[%c0_6, %c0_7] : memref<128x256xbf16, #tpu.memory_space<vmem>>, vector<128x256xbf16>
    %cst_8 = arith.constant dense<0.000000e+00> : vector<8x256xf32>
    %10 = tpu.matmul %8, %9, %cst_8 {dimension_numbers = #tpu.dot_dimension_numbers<[1], [0], [0], [1], [0, 0, 1, 1], [], []>} : vector<8x128xbf16>, vector<128x256xbf16>, vector<8x256xf32> -> vector<8x256xf32>
    %c0_9 = arith.constant 0 : index
    %c0_10 = arith.constant 0 : index
    %11 = vector.load %arg5[%c0_9, %c0_10] : memref<1x256xf32, #tpu.memory_space<vmem>>, vector<1x256xf32>
    %12 = vector.broadcast %11 : vector<1x256xf32> to vector<8x256xf32>
    %13 = arith.addf %10, %12 : vector<8x256xf32>
    %14 = vector.extract_strided_slice %13 {offsets = [0, 0], sizes = [8, 128], strides = [1, 1]} : vector<8x256xf32> to vector<8x128xf32>
    %cst_11 = arith.constant 0.000000e+00 : f32
    %15 = vector.broadcast %cst_11 : f32 to vector<8x128xf32>
    %16 = arith.maximumf %14, %15 : vector<8x128xf32>
    %c0_12 = arith.constant 0 : index
    %c0_13 = arith.constant 0 : index
    %17 = vector.load %arg7[%c0_12, %c0_13] : memref<8x256xf32, #tpu.memory_space<vmem>>, vector<8x128xf32>
    tpu.vector_store %arg7[%c0_12, %c0_13], %16 {strides = array<i32>} : memref<8x256xf32, #tpu.memory_space<vmem>>, vector<8x128xf32>,
    %18 = vector.extract_strided_slice %13 {offsets = [0, 128], sizes = [8, 128], strides = [1, 1]} : vector<8x256xf32> to vector<8x128xf32>
    %c0_14 = arith.constant 0 : index
    %c0_15 = arith.constant 0 : index
    %19 = vector.load %arg6[%c0_14, %c0_15] : memref<8x128xbf16, #tpu.memory_space<vmem>>, vector<8x128xbf16>
    %20 = arith.extf %19 : vector<8x128xbf16> to vector<8x128xf32>
    %21 = arith.addf %18, %20 : vector<8x128xf32>
    %cst_16 = arith.constant 5.000000e+00 : f32
    %22 = vector.broadcast %cst_16 : f32 to vector<8x128xf32>
    %23 = arith.mulf %21, %22 : vector<8x128xf32>
    %24 = tpu.iota {dimensions = array<i32: 1>} : vector<1x128xi32>
    %c0_i32 = arith.constant 0 : i32
    %25 = vector.broadcast %c0_i32 : i32 to vector<1x128xi32>
    %26 = arith.cmpi sge, %24, %25 : vector<1x128xi32>
    %c4_i32 = arith.constant 4 : i32
    %27 = vector.broadcast %c4_i32 : i32 to vector<1x128xi32>
    %28 = arith.cmpi slt, %24, %27 : vector<1x128xi32>
    %29 = arith.andi %26, %28 : vector<1x128xi1>
    %c4_i32_17 = arith.constant 4 : i32
    %30 = vector.broadcast %c4_i32_17 : i32 to vector<1x128xi32>
    %31 = arith.cmpi sge, %24, %30 : vector<1x128xi32>
    %c9_i32 = arith.constant 9 : i32
    %32 = vector.broadcast %c9_i32 : i32 to vector<1x128xi32>
    %33 = arith.cmpi slt, %24, %32 : vector<1x128xi32>
    %34 = arith.andi %31, %33 : vector<1x128xi1>
    %cst_18 = arith.constant 0.000000e+00 : f32
    %35 = vector.broadcast %cst_18 : f32 to vector<8x128xf32>
    %cst_19 = arith.constant -1.000000e+30 : f32
    %36 = vector.shape_cast %29 : vector<1x128xi1> to vector<1x128xi1>
    %37 = vector.broadcast %36 : vector<1x128xi1> to vector<8x128xi1>
    %38 = vector.broadcast %cst_19 : f32 to vector<8x128xf32>
    %39 = arith.select %37, %23, %38 : vector<8x128xi1>, vector<8x128xf32>
    %cst_20 = arith.constant dense<0xFF800000> : vector<8xf32>
    %40 = vector.multi_reduction <maximumf>, %39, %cst_20 [1] : vector<8x128xf32> to vector<8xf32>
    %41 = vector.shape_cast %40 : vector<8xf32> to vector<8x1xf32>
    %42 = vector.shape_cast %29 : vector<1x128xi1> to vector<1x128xi1>
    %43 = vector.broadcast %42 : vector<1x128xi1> to vector<8x128xi1>
    %44 = vector.shape_cast %41 : vector<8x1xf32> to vector<8x1xf32>
    %45 = vector.broadcast %44 : vector<8x1xf32> to vector<8x128xf32>
    %46 = arith.select %43, %45, %35 : vector<8x128xi1>, vector<8x128xf32>
    %cst_21 = arith.constant -1.000000e+30 : f32
    %47 = vector.shape_cast %34 : vector<1x128xi1> to vector<1x128xi1>
    %48 = vector.broadcast %47 : vector<1x128xi1> to vector<8x128xi1>
    %49 = vector.broadcast %cst_21 : f32 to vector<8x128xf32>
    %50 = arith.select %48, %23, %49 : vector<8x128xi1>, vector<8x128xf32>
    %cst_22 = arith.constant dense<0xFF800000> : vector<8xf32>
    %51 = vector.multi_reduction <maximumf>, %50, %cst_22 [1] : vector<8x128xf32> to vector<8xf32>
    %52 = vector.shape_cast %51 : vector<8xf32> to vector<8x1xf32>
    %53 = vector.shape_cast %34 : vector<1x128xi1> to vector<1x128xi1>
    %54 = vector.broadcast %53 : vector<1x128xi1> to vector<8x128xi1>
    %55 = vector.shape_cast %52 : vector<8x1xf32> to vector<8x1xf32>
    %56 = vector.broadcast %55 : vector<8x1xf32> to vector<8x128xf32>
    %57 = arith.select %54, %56, %46 : vector<8x128xi1>, vector<8x128xf32>
    %58 = arith.subf %23, %57 : vector<8x128xf32>
    %59 = math.exp %58 : vector<8x128xf32>
    %cst_23 = arith.constant 1.000000e+00 : f32
    %60 = vector.broadcast %cst_23 : f32 to vector<8x128xf32>
    %cst_24 = arith.constant 0.000000e+00 : f32
    %61 = vector.shape_cast %29 : vector<1x128xi1> to vector<1x128xi1>
    %62 = vector.broadcast %61 : vector<1x128xi1> to vector<8x128xi1>
    %63 = vector.broadcast %cst_24 : f32 to vector<8x128xf32>
    %64 = arith.select %62, %59, %63 : vector<8x128xi1>, vector<8x128xf32>
    %cst_25 = arith.constant dense<0.000000e+00> : vector<8xf32>
    %65 = vector.multi_reduction <add>, %64, %cst_25 [1] : vector<8x128xf32> to vector<8xf32>
    %66 = vector.shape_cast %65 : vector<8xf32> to vector<8x1xf32>
    %67 = tpu.reciprocal %66 {approx = true} : vector<8x1xf32> -> vector<8x1xf32>
    %68 = vector.shape_cast %29 : vector<1x128xi1> to vector<1x128xi1>
    %69 = vector.broadcast %68 : vector<1x128xi1> to vector<8x128xi1>
    %70 = vector.shape_cast %67 : vector<8x1xf32> to vector<8x1xf32>
    %71 = vector.broadcast %70 : vector<8x1xf32> to vector<8x128xf32>
    %72 = arith.select %69, %71, %60 : vector<8x128xi1>, vector<8x128xf32>
    %cst_26 = arith.constant 0.000000e+00 : f32
    %73 = vector.shape_cast %34 : vector<1x128xi1> to vector<1x128xi1>
    %74 = vector.broadcast %73 : vector<1x128xi1> to vector<8x128xi1>
    %75 = vector.broadcast %cst_26 : f32 to vector<8x128xf32>
    %76 = arith.select %74, %59, %75 : vector<8x128xi1>, vector<8x128xf32>
    %cst_27 = arith.constant dense<0.000000e+00> : vector<8xf32>
    %77 = vector.multi_reduction <add>, %76, %cst_27 [1] : vector<8x128xf32> to vector<8xf32>
    %78 = vector.shape_cast %77 : vector<8xf32> to vector<8x1xf32>
    %79 = tpu.reciprocal %78 {approx = true} : vector<8x1xf32> -> vector<8x1xf32>
    %80 = vector.shape_cast %34 : vector<1x128xi1> to vector<1x128xi1>
    %81 = vector.broadcast %80 : vector<1x128xi1> to vector<8x128xi1>
    %82 = vector.shape_cast %79 : vector<8x1xf32> to vector<8x1xf32>
    %83 = vector.broadcast %82 : vector<8x1xf32> to vector<8x128xf32>
    %84 = arith.select %81, %83, %72 : vector<8x128xi1>, vector<8x128xf32>
    %85 = arith.mulf %59, %84 : vector<8x128xf32>
    %c0_28 = arith.constant 0 : index
    %c128 = arith.constant 128 : index
    %86 = vector.load %arg7[%c0_28, %c128] : memref<8x256xf32, #tpu.memory_space<vmem>>, vector<8x128xf32>
    tpu.vector_store %arg7[%c0_28, %c128], %85 {strides = array<i32>} : memref<8x256xf32, #tpu.memory_space<vmem>>, vector<8x128xf32>,
    return
  }
  func.func @transform_0(%arg0: i32) -> (i32, i32) {
    %c0_i32 = arith.constant 0 : i32
    %c0_i32_0 = arith.constant 0 : i32
    return %arg0, %c0_i32 : i32, i32
  }
  func.func @transform_1(%arg0: i32) -> (i32, i32) {
    %c0_i32 = arith.constant 0 : i32
    %c0_i32_0 = arith.constant 0 : i32
    %c0_i32_1 = arith.constant 0 : i32
    return %c0_i32, %c0_i32_0 : i32, i32
  }
  func.func @transform_2(%arg0: i32) -> (i32, i32) {
    %c0_i32 = arith.constant 0 : i32
    %c0_i32_0 = arith.constant 0 : i32
    %c0_i32_1 = arith.constant 0 : i32
    return %c0_i32, %c0_i32_0 : i32, i32
  }
  func.func @transform_3(%arg0: i32) -> (i32, i32) {
    %c0_i32 = arith.constant 0 : i32
    %c0_i32_0 = arith.constant 0 : i32
    %c0_i32_1 = arith.constant 0 : i32
    return %c0_i32, %c0_i32_0 : i32, i32
  }
  func.func @transform_4(%arg0: i32) -> (i32, i32) {
    %c0_i32 = arith.constant 0 : i32
    %c0_i32_0 = arith.constant 0 : i32
    %c0_i32_1 = arith.constant 0 : i32
    return %c0_i32, %c0_i32_0 : i32, i32
  }
  func.func @transform_5(%arg0: i32) -> (i32, i32) {
    %c0_i32 = arith.constant 0 : i32
    %c0_i32_0 = arith.constant 0 : i32
    return %arg0, %c0_i32 : i32, i32
  }
  func.func @transform_6(%arg0: i32) -> (i32, i32) {
    %c0_i32 = arith.constant 0 : i32
    %c0_i32_0 = arith.constant 0 : i32
    return %arg0, %c0_i32 : i32, i32
  }
}

</mosaic_0001>

<llo_original>
// kernel: tpu_custom_call.1
$region0: #{tpu_custom_call.1}
  #allocation0 [shape = 'u32[]', space=smem, size = 0x4, offset = 0x4, fixed_abs, tag = 'smem constant byte address 0x4 - core index']
  #allocation1 [shape = 'u32[144,128]{1,0:T(1,128)}', space=vmem, size = 0x12000, scoped, tag = 'internal scratch']
  %s0 = inlined_call_operand.hbm [shape: bf16[8,128], index: 0, kind: input, shape index: {}]
  %s1 = inlined_call_operand.hbm [shape: bf16[128,128], index: 1, kind: input, shape index: {}]
  %s2 = inlined_call_operand.vmem [shape: f32[1,128], index: 2, kind: input, shape index: {}]
  %s3 = inlined_call_operand.hbm [shape: bf16[128,256], index: 3, kind: input, shape index: {}]
  %s4 = inlined_call_operand.vmem [shape: f32[1,256], index: 4, kind: input, shape index: {}]
  %s5 = inlined_call_operand.vmem [shape: bf16[8,128], index: 5, kind: input, shape index: {}]
  %s6 = inlined_call_operand.hbm [shape: f32[8,256], index: 6, kind: output, shape index: {}]
  %s7 = sld [smem:[#allocation0]]
  $region46: #{tpu_custom_call.1} parent=0
    _
  %s9 = ssub.s32 1, %s7
  %s10 = scalar_select 0, %s9, %s7
  $region1: #{tpu_custom_call.1} parent=0
    #allocation2 [shape = 'u8[2048]{0}', space=vmem, size = 0x800, scoped, tag = 'input window, operand 0, single buffered']
    #allocation3 [shape = 's32[1]{0}', space=sflag, size = 0x4, scoped, tag = 'scoped memory for tpu_custom_call.1']
    #allocation4 [shape = 's32[1]{0}', space=sflag, size = 0x4, scoped, tag = 'scoped memory for tpu_custom_call.1']
    #allocation5 [shape = 'u8[32768]{0}', space=vmem, size = 0x8000, scoped, tag = 'input window, operand 1, single buffered']
    #allocation6 [shape = 's32[1]{0}', space=sflag, size = 0x4, scoped, tag = 'scoped memory for tpu_custom_call.1']
    #allocation7 [shape = 'u8[65536]{0}', space=vmem, size = 0x10000, scoped, tag = 'input window, operand 3, single buffered']
    #allocation8 [shape = 'u8[8192]{0}', space=vmem, size = 0x2000, scoped, tag = 'output window, operand 0, single buffered']
    %11 = vsyncpa [#allocation3], 0
    %12 = vsyncpa [#allocation6], 0
    %13 = vsyncpa [#allocation4], 0
    // Predicated region
    $region2: #{tpu_custom_call.1} parent=1 // pred_check
      _
    $region3: #{tpu_custom_call.1} parent=1 // pred_check_branch
      %15 = sbr.rel (0) target = $region5
    $region4: #{tpu_custom_call.1} parent=1 // pred_region
      %s17 = ssub.s32 64, 64
      %18 = vsyncadd [#allocation3], %s17
      %s20 = sshll.u32 [#allocation2], 4
      %s21 = int_to_ptr.vmem [resolvable:$true] %s20
      %23 = dma.hbm_to_vmem [thread:$0]  %s0, 64, %s21, [#allocation3]
    $region5: #{tpu_custom_call.1} parent=1 // pred_fallthru
      _
    // Predicated region
    $region6: #{tpu_custom_call.1} parent=1 // pred_check
      _
    $region7: #{tpu_custom_call.1} parent=1 // pred_check_branch
      %25 = sbr.rel (0) target = $region9
    $region8: #{tpu_custom_call.1} parent=1 // pred_region
      %s27 = ssub.s32 1024, 1024
      %28 = vsyncadd [#allocation6], %s27
      %s29 = sshll.u32 [#allocation5], 4
      %s30 = int_to_ptr.vmem [resolvable:$true] %s29
      %35 = dma.hbm_to_vmem [thread:$0]  %s1, 1024, %s30, [#allocation6], 64, 64, 4
    $region9: #{tpu_custom_call.1} parent=1 // pred_fallthru
      _
    // Predicated region
    $region10: #{tpu_custom_call.1} parent=1 // pred_check
      _
    $region11: #{tpu_custom_call.1} parent=1 // pred_check_branch
      %37 = sbr.rel (0) target = $region13
    $region12: #{tpu_custom_call.1} parent=1 // pred_region
      _
    $region13: #{tpu_custom_call.1} parent=1 // pred_fallthru
      _
    // Predicated region
    $region14: #{tpu_custom_call.1} parent=1 // pred_check
      _
    $region15: #{tpu_custom_call.1} parent=1 // pred_check_branch
      %39 = sbr.rel (0) target = $region17
    $region16: #{tpu_custom_call.1} parent=1 // pred_region
      %s41 = ssub.s32 2048, 2048
      %42 = vsyncadd [#allocation6], %s41
      %s43 = sshll.u32 [#allocation7], 4
      %s44 = int_to_ptr.vmem [resolvable:$true] %s43
      %49 = dma.hbm_to_vmem [thread:$0]  %s3, 2048, %s44, [#allocation6], 128, 128, 8
    $region17: #{tpu_custom_call.1} parent=1 // pred_fallthru
      _
    // Predicated region
    $region18: #{tpu_custom_call.1} parent=1 // pred_check
      _
    $region19: #{tpu_custom_call.1} parent=1 // pred_check_branch
      %51 = sbr.rel (0) target = $region21
    $region20: #{tpu_custom_call.1} parent=1 // pred_region
      _
    $region21: #{tpu_custom_call.1} parent=1 // pred_fallthru
      _
    // Predicated region
    $region22: #{tpu_custom_call.1} parent=1 // pred_check
      _
    $region23: #{tpu_custom_call.1} parent=1 // pred_check_branch
      %53 = sbr.rel (0) target = $region25
    $region24: #{tpu_custom_call.1} parent=1 // pred_region
      _
    $region25: #{tpu_custom_call.1} parent=1 // pred_fallthru
      _
    // Predicated region
    $region26: #{tpu_custom_call.1} parent=1 // pred_check
      _
    $region27: #{tpu_custom_call.1} parent=1 // pred_check_branch
      %55 = sbr.rel (0) target = $region29
    $region28: #{tpu_custom_call.1} parent=1 // pred_region
      %56 = dma.done [#allocation3], 64
    $region29: #{tpu_custom_call.1} parent=1 // pred_fallthru
      _
    // Predicated region
    $region30: #{tpu_custom_call.1} parent=1 // pred_check
      _
    $region31: #{tpu_custom_call.1} parent=1 // pred_check_branch
      %58 = sbr.rel (0) target = $region33
    $region32: #{tpu_custom_call.1} parent=1 // pred_region
      %59 = dma.done [#allocation6], 1024
    $region33: #{tpu_custom_call.1} parent=1 // pred_fallthru
      _
    // Predicated region
    $region34: #{tpu_custom_call.1} parent=1 // pred_check
      _
    $region35: #{tpu_custom_call.1} parent=1 // pred_check_branch
      %61 = sbr.rel (0) target = $region37
    $region36: #{tpu_custom_call.1} parent=1 // pred_region
      %62 = dma.done [#allocation6], 2048
    $region37: #{tpu_custom_call.1} parent=1 // pred_fallthru
      _
    %v64 = vld [vmem:[#allocation2] sm:$0xf]
    %v65 = vld [vmem:[#allocation5] sm:$0xf]
    %v66 = vld [vmem:[#allocation5 + $0x4] sm:$0xf]
    %v67 = vld [vmem:[#allocation5 + $0x8] sm:$0xf]
    %v68 = vld [vmem:[#allocation5 + $0xc] sm:$0xf]
    %v69 = vld [vmem:[#allocation5 + $0x10] sm:$0xf]
    %v70 = vld [vmem:[#allocation5 + $0x14] sm:$0xf]
    %v71 = vld [vmem:[#allocation5 + $0x18] sm:$0xf]
    %v72 = vld [vmem:[#allocation5 + $0x1c] sm:$0xf]
    %v73 = vld [vmem:[#allocation5 + $0x20] sm:$0xf]
    %v74 = vld [vmem:[#allocation5 + $0x24] sm:$0xf]
    %v75 = vld [vmem:[#allocation5 + $0x28] sm:$0xf]
    %v76 = vld [vmem:[#allocation5 + $0x2c] sm:$0xf]
    %v77 = vld [vmem:[#allocation5 + $0x30] sm:$0xf]
    %v78 = vld [vmem:[#allocation5 + $0x34] sm:$0xf]
    %v79 = vld [vmem:[#allocation5 + $0x38] sm:$0xf]
    %v80 = vld [vmem:[#allocation5 + $0x3c] sm:$0xf]
    %v81 = vld [vmem:[%s2] sm:$0x1]
    %v83 = vlaneseq
    %v84 = vshrl.u32 %v83, 7
    %v85 = vsub.s32 0, %v84
    %v86 = vrot.slane %v81, %v85
    %v104 = vunpack.c.l.b16 %v65
    %v105 = vunpack.c.l.b16 %v66
    %v106 = vunpack.c.l.b16 %v67
    %v107 = vunpack.c.l.b16 %v68
    %v108 = vunpack.c.l.b16 %v69
    %v109 = vunpack.c.l.b16 %v70
    %v110 = vunpack.c.l.b16 %v71
    %v111 = vunpack.c.l.b16 %v72
    %v112 = vunpack.c.l.b16 %v73
    %v113 = vunpack.c.l.b16 %v74
    %v114 = vunpack.c.l.b16 %v75
    %v115 = vunpack.c.l.b16 %v76
    %v116 = vunpack.c.l.b16 %v77
    %v117 = vunpack.c.l.b16 %v78
    %v118 = vunpack.c.l.b16 %v79
    %v119 = vunpack.c.l.b16 %v80
    %v120 = vpack.c.b16 %v105, %v104
    %v121 = vpack.c.b16 %v107, %v106
    %v122 = vpack.c.b16 %v109, %v108
    %v123 = vpack.c.b16 %v111, %v110
    %v124 = vpack.c.b16 %v113, %v112
    %v125 = vpack.c.b16 %v115, %v114
    %v126 = vpack.c.b16 %v117, %v116
    %v127 = vpack.c.b16 %v119, %v118
    %136 = vmatprep.subr.bf16.mxu0 0
    %137 = vmatpush1.bf16.msra.mxu0 %v127
    %138 = vmatprep.subr.bf16.mxu0 0
    %139 = vmatpush1.bf16.msra.mxu0 %v126
    %140 = vmatprep.subr.bf16.mxu0 0
    %141 = vmatpush1.bf16.msra.mxu0 %v125
    %142 = vmatprep.subr.bf16.mxu0 0
    %143 = vmatpush1.bf16.msra.mxu0 %v124
    %144 = vmatprep.subr.bf16.mxu0 0
    %145 = vmatpush1.bf16.msra.mxu0 %v123
    %146 = vmatprep.subr.bf16.mxu0 0
    %147 = vmatpush1.bf16.msra.mxu0 %v122
    %148 = vmatprep.subr.bf16.mxu0 0
    %149 = vmatpush1.bf16.msra.mxu0 %v121
    %150 = vmatprep.subr.bf16.mxu0 0
    %151 = vmatpush1.bf16.msra.mxu0 %v120
    %152 = vmatprep.subr.bf16.mxu0 0
    %153 = vmatpush2.bf16.msra.mxu0 0
    %154 = vmatprep.subr.bf16.mxu0 0
    %155 = vmatpush2.bf16.msra.mxu0 0
    %156 = vmatprep.subr.bf16.mxu0 0
    %157 = vmatpush2.bf16.msra.mxu0 0
    %158 = vmatprep.subr.bf16.mxu0 0
    %159 = vmatpush2.bf16.msra.mxu0 0
    %160 = vmatprep.subr.bf16.mxu0 0
    %161 = vmatpush2.bf16.msra.mxu0 0
    %162 = vmatprep.subr.bf16.mxu0 0
    %163 = vmatpush2.bf16.msra.mxu0 0
    %164 = vmatprep.subr.bf16.mxu0 0
    %165 = vmatpush2.bf16.msra.mxu0 0
    %166 = vmatprep.subr.bf16.mxu0 0
    %167 = vmatpush2.bf16.msra.mxu0 0
    %168 = vmatprep.mubr.bf16.mxu0 0
    %169 = vmatmul.mubr.bf16.gmra.mxu0 %v64
    %v170 = vpop.f32.mrf.mxu0
    %v171 = vadd.f32 %v86, %v170
    %v172 = vpop.f32.mrf.mxu0
    %v173 = vpop.f32.mrf.mxu0
    %v174 = vpop.f32.mrf.mxu0
    %175 = vdwg.mxu0
    %v176 = vmax.f32 %v171, 0.0
    %v177 = vpack.c.bf16 %v176, %v176
    %v178 = vld [vmem:[#allocation7] sm:$0xff]
    %v179 = vld [vmem:[#allocation7 + $0x8] sm:$0xff]
    %v180 = vld [vmem:[#allocation7 + $0x10] sm:$0xff]
    %v181 = vld [vmem:[#allocation7 + $0x18] sm:$0xff]
    %v182 = vld [vmem:[#allocation7 + $0x20] sm:$0xff]
    %v183 = vld [vmem:[#allocation7 + $0x28] sm:$0xff]
    %v184 = vld [vmem:[#allocation7 + $0x30] sm:$0xff]
    %v185 = vld [vmem:[#allocation7 + $0x38] sm:$0xff]
    %v186 = vld [vmem:[#allocation7 + $0x40] sm:$0xff]
    %v187 = vld [vmem:[#allocation7 + $0x48] sm:$0xff]
    %v188 = vld [vmem:[#allocation7 + $0x50] sm:$0xff]
    %v189 = vld [vmem:[#allocation7 + $0x58] sm:$0xff]
    %v190 = vld [vmem:[#allocation7 + $0x60] sm:$0xff]
    %v191 = vld [vmem:[#allocation7 + $0x68] sm:$0xff]
    %v192 = vld [vmem:[#allocation7 + $0x70] sm:$0xff]
    %v193 = vld [vmem:[#allocation7 + $0x78] sm:$0xff]
    %v194 = vld [vmem:[%s4] sm:$0x3]
    %v196 = vlaneseq
    %v197 = vshrl.u32 %v196, 7
    %v198 = vsub.s32 0, %v197
    %v199 = vrot.slane %v194, %v198
    %v200 = vlaneseq
    %v201 = vshrl.u32 %v200, 7
    %v202 = vsub.s32 1, %v201
    %v203 = vrot.slane %v194, %v202
    %v222 = vunpack.c.l.b16 %v178
    %v223 = vunpack.c.h.b16 %v178
    %v224 = vunpack.c.l.b16 %v179
    %v225 = vunpack.c.h.b16 %v179
    %v226 = vunpack.c.l.b16 %v180
    %v227 = vunpack.c.h.b16 %v180
    %v228 = vunpack.c.l.b16 %v181
    %v229 = vunpack.c.h.b16 %v181
    %v230 = vunpack.c.l.b16 %v182
    %v231 = vunpack.c.h.b16 %v182
    %v232 = vunpack.c.l.b16 %v183
    %v233 = vunpack.c.h.b16 %v183
    %v234 = vunpack.c.l.b16 %v184
    %v235 = vunpack.c.h.b16 %v184
    %v236 = vunpack.c.l.b16 %v185
    %v237 = vunpack.c.h.b16 %v185
    %v238 = vunpack.c.l.b16 %v186
    %v239 = vunpack.c.h.b16 %v186
    %v240 = vunpack.c.l.b16 %v187
    %v241 = vunpack.c.h.b16 %v187
    %v242 = vunpack.c.l.b16 %v188
    %v243 = vunpack.c.h.b16 %v188
    %v244 = vunpack.c.l.b16 %v189
    %v245 = vunpack.c.h.b16 %v189
    %v246 = vunpack.c.l.b16 %v190
    %v247 = vunpack.c.h.b16 %v190
    %v248 = vunpack.c.l.b16 %v191
    %v249 = vunpack.c.h.b16 %v191
    %v250 = vunpack.c.l.b16 %v192
    %v251 = vunpack.c.h.b16 %v192
    %v252 = vunpack.c.l.b16 %v193
    %v253 = vunpack.c.h.b16 %v193
    %v254 = vpack.c.b16 %v224, %v222
    %v255 = vpack.c.b16 %v225, %v223
    %v256 = vpack.c.b16 %v228, %v226
    %v257 = vpack.c.b16 %v229, %v227
    %v258 = vpack.c.b16 %v232, %v230
    %v259 = vpack.c.b16 %v233, %v231
    %v260 = vpack.c.b16 %v236, %v234
    %v261 = vpack.c.b16 %v237, %v235
    %v262 = vpack.c.b16 %v240, %v238
    %v263 = vpack.c.b16 %v241, %v239
    %v264 = vpack.c.b16 %v244, %v242
    %v265 = vpack.c.b16 %v245, %v243
    %v266 = vpack.c.b16 %v248, %v246
    %v267 = vpack.c.b16 %v249, %v247
    %v268 = vpack.c.b16 %v252, %v250
    %v269 = vpack.c.b16 %v253, %v251
    %286 = vmatprep.subr.bf16.mxu0 %v269
    %287 = vmatpush1.bf16.msra.mxu0 %v268
    %288 = vmatprep.subr.bf16.mxu0 %v267
    %289 = vmatpush1.bf16.msra.mxu0 %v266
    %290 = vmatprep.subr.bf16.mxu0 %v265
    %291 = vmatpush1.bf16.msra.mxu0 %v264
    %292 = vmatprep.subr.bf16.mxu0 %v263
    %293 = vmatpush1.bf16.msra.mxu0 %v262
    %294 = vmatprep.subr.bf16.mxu0 %v261
    %295 = vmatpush1.bf16.msra.mxu0 %v260
    %296 = vmatprep.subr.bf16.mxu0 %v259
    %297 = vmatpush1.bf16.msra.mxu0 %v258
    %298 = vmatprep.subr.bf16.mxu0 %v257
    %299 = vmatpush1.bf16.msra.mxu0 %v256
    %300 = vmatprep.subr.bf16.mxu0 %v255
    %301 = vmatpush1.bf16.msra.mxu0 %v254
    %302 = vmatprep.subr.bf16.mxu0 0
    %303 = vmatpush2.bf16.msra.mxu0 0
    %304 = vmatprep.subr.bf16.mxu0 0
    %305 = vmatpush2.bf16.msra.mxu0 0
    %306 = vmatprep.subr.bf16.mxu0 0
    %307 = vmatpush2.bf16.msra.mxu0 0
    %308 = vmatprep.subr.bf16.mxu0 0
    %309 = vmatpush2.bf16.msra.mxu0 0
    %310 = vmatprep.subr.bf16.mxu0 0
    %311 = vmatpush2.bf16.msra.mxu0 0
    %312 = vmatprep.subr.bf16.mxu0 0
    %313 = vmatpush2.bf16.msra.mxu0 0
    %314 = vmatprep.subr.bf16.mxu0 0
    %315 = vmatpush2.bf16.msra.mxu0 0
    %316 = vmatprep.subr.bf16.mxu0 0
    %317 = vmatpush2.bf16.msra.mxu0 0
    %318 = vmatprep.mubr.bf16.mxu0 0
    %319 = vmatmul.mubr.bf16.gmra.mxu0 %v177
    %v320 = vpop.f32.mrf.mxu0
    %v321 = vadd.f32 %v199, %v320
    %v322 = vpop.f32.mrf.mxu0
    %v323 = vadd.f32 %v203, %v322
    %v324 = vpop.f32.mrf.mxu0
    %v325 = vpop.f32.mrf.mxu0
    %326 = vdwg.mxu0
    %v327 = vmax.f32 %v321, 0.0
    %328 = vst [vmem:[#allocation8] sm:$0xff] %v327
    %v329 = vld [vmem:[%s5] sm:$0xf]
    %v330 = vunpack.c.l.bf16 %v329
    %v331 = vadd.f32 %v323, %v330
    %v332 = vmul.f32 %v331, 5.0
    %v333 = vlaneseq
    %v334 = vand.u32 %v333, 127
    %vm335 = vcmp.ge.s32.totalorder %v334, 0
    %vm336 = vcmp.lt.s32.totalorder %v334, 4
    %vm337 = vmand %vm335, %vm336
    %vm338 = vcmp.ge.s32.totalorder %v334, 4
    %vm339 = vcmp.lt.s32.totalorder %v334, 9
    %vm340 = vmand %vm338, %vm339
    %v341 = vsel %vm337, 1, 0
    %vm342 = vcmp.eq.s32.totalorder %v341, 1
    %v343 = vsel %vm342, %v332, -1e+30
    %344 = vmax.xlane.f32.xlu0 %v343
    %v345 = vpop.xlane.xlu0 %344
    %v346 = vsel %vm342, %v345, 0.0
    %v347 = vsel %vm340, 1, 0
    %vm348 = vcmp.eq.s32.totalorder %v347, 1
    %v349 = vsel %vm348, %v332, -1e+30
    %350 = vmax.xlane.f32.xlu0 %v349
    %v351 = vpop.xlane.xlu0 %350
    %v352 = vsel %vm348, %v351, %v346
    %v353 = vsub.f32 %v332, %v352
    %v354 = vmul.f32 %v353, 1.442695
    %v355 = vpow.pop %v354
    %v356 = vsel %vm342, %v355, 0.0
    %357 = vadd.xlane.f32.xlu0 %v356
    %v358 = vpop.xlane.xlu0 %357
    %v359 = vrcp.pop %v358
    %v360 = vsel %vm342, %v359, 1.0
    %v361 = vsel %vm348, %v355, 0.0
    %362 = vadd.xlane.f32.xlu0 %v361
    %v363 = vpop.xlane.xlu0 %362
    %v364 = vrcp.pop %v363
    %v365 = vsel %vm348, %v364, %v360
    %v366 = vmul.f32 %v355, %v365
    %367 = vst [vmem:[#allocation8 + $0x8] sm:$0xff] %v366
    // Predicated region
    $region38: #{tpu_custom_call.1} parent=1 // pred_check
      _
    $region39: #{tpu_custom_call.1} parent=1 // pred_check_branch
      %369 = sbr.rel (0) target = $region41
    $region40: #{tpu_custom_call.1} parent=1 // pred_region
      %s371 = ssub.s32 256, 256
      %372 = vsyncadd [#allocation4], %s371
      %s374 = sshll.u32 [#allocation8], 4
      %s375 = int_to_ptr.vmem [resolvable:$true] %s374
      %377 = dma.vmem_to_hbm [thread:$0]  %s375, 256, %s6, [#allocation4]
    $region41: #{tpu_custom_call.1} parent=1 // pred_fallthru
      _
    // Predicated region
    $region42: #{tpu_custom_call.1} parent=1 // pred_check
      _
    $region43: #{tpu_custom_call.1} parent=1 // pred_check_branch
      %379 = sbr.rel (0) target = $region45
    $region44: #{tpu_custom_call.1} parent=1 // pred_region
      %380 = dma.done [#allocation4], 256
    $region45: #{tpu_custom_call.1} parent=1 // pred_fallthru
      _
    %381 = vsyncpa [#allocation3], 1
    %382 = vsyncpa [#allocation6], 1
    %383 = vsyncpa [#allocation4], 1

</llo_original>
